<compile_context>
chip_gen: v5e
topology: v5e:2x2
jax: 0.10.0
libtpu: 0.0.40
codegen_flags: <defaults>
</compile_context>

<pallas_src>
import functools

import jax
import jax.numpy as jnp
from jax.experimental import pallas as pl
from jax.experimental.pallas import tpu as pltpu


def _round_up(x, m):
    return ((x + m - 1) // m) * m


def _default_compute_dtype():
    """f32 everywhere except v5e, where bf16 matmuls avoid 3-pass f32 MXU."""
    try:
        kind = jax.devices()[0].device_kind.lower()
        if "v5 lite" in kind or "v5lite" in kind or "v5e" in kind:
            return jnp.bfloat16
    except Exception:
        pass
    return jnp.float32


def _select_batch_tile(B, batch_tile):
    # Cap at 2048 rows so double-buffered tiles + f32 intermediates stay well
    # under v5e's 16 MiB default scoped-VMEM limit (v6e/v7x have more headroom).
    batch_tile = min(batch_tile, 2048)
    if B <= 8:
        return 8
    # >=2 grid steps so v7x's two TensorCores both get work; >=4 steps for
    # large batches so DMA prefetch/writeback overlaps compute.
    steps = 4 if B >= 4 * 512 else 2
    tb = _round_up(pl.cdiv(B, steps), 8)
    return max(8, min(batch_tile, tb))


def _dueling_dqn_kernel(
    x_ref,
    w1_ref, b1_ref,
    w2_ref, b2_ref,
    wh_ref, bh_ref,      # fused value/advantage first layers: (128, 128)
    wo_ref, bo_ref,      # fused block-diagonal second layers: (128, A_pad)
    q_ref,               # narrow output block: (tb, action_size)
    *, action_size,
):
    cd = w1_ref.dtype               # matmul compute dtype (f32 or bf16)
    x = x_ref[...].astype(cd)       # cast f32 state -> compute dtype in VMEM

    # feature_layer: Linear(S,128) + ReLU, Linear(128,128) + ReLU
    h = jnp.dot(x, w1_ref[...], preferred_element_type=jnp.float32) + b1_ref[...]
    h = jnp.maximum(h, 0.0).astype(cd)
    h = jnp.dot(h, w2_ref[...], preferred_element_type=jnp.float32) + b2_ref[...]
    h = jnp.maximum(h, 0.0).astype(cd)

    # fused head hidden: [value_hidden(64) | advantage_hidden(64)] -> (B, 128)
    hh = jnp.dot(h, wh_ref[...], preferred_element_type=jnp.float32) + bh_ref[...]
    hh = jnp.maximum(hh, 0.0).astype(cd)

    # fused head output: cols [0, A) = advantage, col A = value, rest = 0
    out = jnp.dot(hh, wo_ref[...], preferred_element_type=jnp.float32) + bo_ref[...]

    col = jax.lax.broadcasted_iota(jnp.int32, out.shape, 1)
    adv_mask = col < action_size
    adv = jnp.where(adv_mask, out, 0.0)
    # mean over the *real* advantage columns only
    a_mean = jnp.sum(adv, axis=1, keepdims=True) * (1.0 / action_size)
    v = out[:, action_size:action_size + 1]                     # (B, 1)
    # store only the real Q columns (narrow output -> minimal HBM writeback)
    q_ref[...] = adv[:, :action_size] + (v - a_mean)


def prepare_params(params, compute_dtype=None):
    """One-time head fusion + dtype casts (hoisted out of the forward path)."""
    if compute_dtype is None:
        compute_dtype = _default_compute_dtype()
    cd = jnp.dtype(compute_dtype)
    (w1, b1, w2, b2, wv1, bv1, wv2, bv2, wa1, ba1, wa2, ba2) = params
    S = w1.shape[0]
    H = w2.shape[1]          # 128
    HV = wv1.shape[1]        # 64
    A = wa2.shape[1]

    wh = jnp.concatenate([wv1, wa1], axis=1)                 # (128, 128)
    bh = jnp.concatenate([bv1, ba1], axis=1)                 # (1, 128)
    A_pad = max(128, _round_up(A + 1, 128))                  # lane-dense matmul width
    wo = jnp.zeros((H, A_pad), jnp.float32)
    wo = wo.at[HV:, :A].set(wa2)                             # adv hidden -> cols [0, A)
    wo = wo.at[:HV, A].set(wv2[:, 0])                        # value hidden -> col A
    bo = jnp.zeros((1, A_pad), jnp.float32)
    bo = bo.at[0, :A].set(ba2[0])
    bo = bo.at[0, A].set(bv2[0, 0])

    return dict(
        w1=w1.astype(cd), b1=b1,
        w2=w2.astype(cd), b2=b2,
        wh=wh.astype(cd), bh=bh,
        wo=wo.astype(cd), bo=bo,
        state_size=S, hidden=H, action_size=A, action_pad=A_pad,
    )


def dueling_dqn_forward(state, prepared, *, batch_tile=1024):
    """state: (B, state_size) or (B, C, F) f32. Returns q_values (B, action_size)."""
    if state.ndim == 3:
        state = state.reshape(state.shape[0], -1)
    elif state.ndim != 2:
        # PyTorch's un-batched path flattens to 1-D; add a batch dim of 1.
        state = state.reshape(1, -1)
    state = state.astype(jnp.float32)   # kernel casts to compute dtype in VMEM

    B, S = state.shape
    assert S == prepared["state_size"]
    H = prepared["hidden"]
    A = prepared["action_size"]
    A_pad = prepared["action_pad"]
    cd = jnp.dtype(prepared["w1"].dtype)

    tb = _select_batch_tile(B, batch_tile)
    grid = (pl.cdiv(B, tb),)            # ragged last block; no batch padding

    flops = 2 * B * (S * H + H * H + H * H + H * A_pad)
    bytes_accessed = (
        B * S * 4                                       # f32 state in
        + B * A * 4                                     # narrow f32 q out
        + (S * H + 2 * H * H + H * A_pad) * cd.itemsize  # weights
        + (3 * H + A_pad) * 4                           # f32 biases
    )
    cost = pl.CostEstimate(flops=flops, transcendentals=0,
                           bytes_accessed=bytes_accessed)

    resident = lambda i: (0, 0)   # weights stay VMEM-resident across batch tiles
    q = pl.pallas_call(
        functools.partial(_dueling_dqn_kernel, action_size=A),
        out_shape=jax.ShapeDtypeStruct((B, A), jnp.float32),
        grid=grid,
        in_specs=[
            pl.BlockSpec((tb, S), lambda i: (i, 0)),     # state tile
            pl.BlockSpec((S, H), resident),
            pl.BlockSpec((1, H), resident),
            pl.BlockSpec((H, H), resident),
            pl.BlockSpec((1, H), resident),
            pl.BlockSpec((H, H), resident),
            pl.BlockSpec((1, H), resident),
            pl.BlockSpec((H, A_pad), resident),
            pl.BlockSpec((1, A_pad), resident),
        ],
        out_specs=pl.BlockSpec((tb, A), lambda i: (i, 0)),
        compiler_params=pltpu.CompilerParams(
            dimension_semantics=("parallel",)),
        cost_estimate=cost,
    )(state, prepared["w1"], prepared["b1"], prepared["w2"], prepared["b2"],
      prepared["wh"], prepared["bh"], prepared["wo"], prepared["bo"])
    return q


def init_params(key, state_size, action_size):
    """Deterministic init mimicking PyTorch's default Linear init:
    U(-1/sqrt(fan_in), 1/sqrt(fan_in)). Weights stored as (in, out)."""
    def linear(key, fan_in, fan_out):
        kw, kb = jax.random.split(key)
        bound = 1.0 / jnp.sqrt(fan_in)
        w = jax.random.uniform(kw, (fan_in, fan_out), jnp.float32, -bound, bound)
        b = jax.random.uniform(kb, (1, fan_out), jnp.float32, -bound, bound)
        return w, b

    keys = jax.random.split(key, 6)
    w1, b1 = linear(keys[0], state_size, 128)
    w2, b2 = linear(keys[1], 128, 128)
    wv1, bv1 = linear(keys[2], 128, 64)
    wv2, bv2 = linear(keys[3], 64, 1)
    wa1, ba1 = linear(keys[4], 128, 64)
    wa2, ba2 = linear(keys[5], 64, action_size)
    return (w1, b1, w2, b2, wv1, bv1, wv2, bv2, wa1, ba1, wa2, ba2)


if __name__ == "__main__":
    key = jax.random.PRNGKey(0)
    k_params, k_state = jax.random.split(key)

    batch, chan, feat = 2, 4, 16          # 3-D state, flattened to state_size = 64
    state_size = chan * feat
    action_size = 8

    params = init_params(k_params, state_size, action_size)
    state = jax.random.normal(k_state, (batch, chan, feat), dtype=jnp.float32)

    # Pure-JAX reference of the original (un-fused) math.
    x = state.reshape(batch, -1)
    (w1, b1, w2, b2, wv1, bv1, wv2, bv2, wa1, ba1, wa2, ba2) = params
    h = jnp.maximum(x @ w1 + b1, 0.0)
    h = jnp.maximum(h @ w2 + b2, 0.0)
    v = jnp.maximum(h @ wv1 + bv1, 0.0) @ wv2 + bv2
    a = jnp.maximum(h @ wa1 + ba1, 0.0) @ wa2 + ba2
    q_ref = v + (a - a.mean(axis=1, keepdims=True))

    # f32 matmul path (exact semantics of the PyTorch module).
    prep_f32 = prepare_params(params, compute_dtype=jnp.float32)
    q_f32 = jax.block_until_ready(dueling_dqn_forward(state, prep_f32))
    assert q_f32.shape == (batch, action_size)
    assert jnp.allclose(q_f32, q_ref, atol=1e-4, rtol=1e-4)

    # bf16 matmul fast path (MXU); f32 accumulation + f32 epilogue.
    prep_bf16 = prepare_params(params, compute_dtype=jnp.bfloat16)
    q_bf16 = jax.block_until_ready(dueling_dqn_forward(state, prep_bf16))
    assert q_bf16.shape == (batch, action_size)
    assert jnp.allclose(q_bf16, q_ref, atol=5e-2, rtol=5e-2)

    # Larger ragged batch: exercises multi-step grid (v7x megacore path) and the
    # unpadded last block.
    big_b = 1000
    big_state = jax.random.normal(jax.random.PRNGKey(1), (big_b, state_size),
                                  dtype=jnp.float32)
    hb = jnp.maximum(big_state @ w1 + b1, 0.0)
    hb = jnp.maximum(hb @ w2 + b2, 0.0)
    vb = jnp.maximum(hb @ wv1 + bv1, 0.0) @ wv2 + bv2
    ab = jnp.maximum(hb @ wa1 + ba1, 0.0) @ wa2 + ba2
    q_big_ref = vb + (ab - ab.mean(axis=1, keepdims=True))
    q_big = jax.block_until_ready(dueling_dqn_forward(big_state, prep_f32))
    assert q_big.shape == (big_b, action_size)
    assert jnp.allclose(q_big, q_big_ref, atol=1e-4, rtol=1e-4)

    print("KERNEL_OK")
</pallas_src>

<mosaic_0001>
module attributes {stable_mosaic.version = 11 : i64} {
  func.func @_dueling_dqn_kernel(%arg0: i32, %arg1: memref<8x64xf32, #tpu.memory_space<vmem>>, %arg2: memref<64x128xf32, #tpu.memory_space<vmem>>, %arg3: memref<1x128xf32, #tpu.memory_space<vmem>>, %arg4: memref<128x128xf32, #tpu.memory_space<vmem>>, %arg5: memref<1x128xf32, #tpu.memory_space<vmem>>, %arg6: memref<128x128xf32, #tpu.memory_space<vmem>>, %arg7: memref<1x128xf32, #tpu.memory_space<vmem>>, %arg8: memref<128x128xf32, #tpu.memory_space<vmem>>, %arg9: memref<1x128xf32, #tpu.memory_space<vmem>>, %arg10: memref<8x8xf32, #tpu.memory_space<vmem>>) attributes {dimension_semantics = [#tpu.dimension_semantics<parallel>], iteration_bounds = array<i64: 1>, scalar_prefetch = 0 : i64, scratch_operands = 0 : i64, tpu.core_type = #tpu.core_type<tc>, window_params = [{transform_indices = @transform_0, window_bounds = array<i64: 8, 64>}, {pipeline_mode = #tpu.pipeline_mode<synchronous>, transform_indices = @transform_1, window_bounds = array<i64: 64, 128>}, {pipeline_mode = #tpu.pipeline_mode<synchronous>, transform_indices = @transform_2, window_bounds = array<i64: 1, 128>}, {pipeline_mode = #tpu.pipeline_mode<synchronous>, transform_indices = @transform_3, window_bounds = array<i64: 128, 128>}, {pipeline_mode = #tpu.pipeline_mode<synchronous>, transform_indices = @transform_4, window_bounds = array<i64: 1, 128>}, {pipeline_mode = #tpu.pipeline_mode<synchronous>, transform_indices = @transform_5, window_bounds = array<i64: 128, 128>}, {pipeline_mode = #tpu.pipeline_mode<synchronous>, transform_indices = @transform_6, window_bounds = array<i64: 1, 128>}, {pipeline_mode = #tpu.pipeline_mode<synchronous>, transform_indices = @transform_7, window_bounds = array<i64: 128, 128>}, {pipeline_mode = #tpu.pipeline_mode<synchronous>, transform_indices = @transform_8, window_bounds = array<i64: 1, 128>}, {transform_indices = @transform_9, window_bounds = array<i64: 8, 8>}]} {
    %c0 = arith.constant 0 : index
    %c0_0 = arith.constant 0 : index
    %0 = vector.load %arg1[%c0, %c0_0] : memref<8x64xf32, #tpu.memory_space<vmem>>, vector<8x64xf32>
    %c0_1 = arith.constant 0 : index
    %c0_2 = arith.constant 0 : index
    %1 = vector.load %arg2[%c0_1, %c0_2] : memref<64x128xf32, #tpu.memory_space<vmem>>, vector<64x128xf32>
    %cst = arith.constant dense<0.000000e+00> : vector<8x128xf32>
    %2 = tpu.matmul %0, %1, %cst {dimension_numbers = #tpu.dot_dimension_numbers<[1], [0], [0], [1], [0, 0, 1, 1], [], []>} : vector<8x64xf32>, vector<64x128xf32>, vector<8x128xf32> -> vector<8x128xf32>
    %c0_3 = arith.constant 0 : index
    %c0_4 = arith.constant 0 : index
    %3 = vector.load %arg3[%c0_3, %c0_4] : memref<1x128xf32, #tpu.memory_space<vmem>>, vector<1x128xf32>
    %4 = vector.broadcast %3 : vector<1x128xf32> to vector<8x128xf32>
    %5 = arith.addf %2, %4 : vector<8x128xf32>
    %cst_5 = arith.constant 0.000000e+00 : f32
    %6 = vector.broadcast %cst_5 : f32 to vector<8x128xf32>
    %7 = arith.maximumf %5, %6 : vector<8x128xf32>
    %c0_6 = arith.constant 0 : index
    %c0_7 = arith.constant 0 : index
    %8 = vector.load %arg4[%c0_6, %c0_7] : memref<128x128xf32, #tpu.memory_space<vmem>>, vector<128x128xf32>
    %cst_8 = arith.constant dense<0.000000e+00> : vector<8x128xf32>
    %9 = tpu.matmul %7, %8, %cst_8 {dimension_numbers = #tpu.dot_dimension_numbers<[1], [0], [0], [1], [0, 0, 1, 1], [], []>} : vector<8x128xf32>, vector<128x128xf32>, vector<8x128xf32> -> vector<8x128xf32>
    %c0_9 = arith.constant 0 : index
    %c0_10 = arith.constant 0 : index
    %10 = vector.load %arg5[%c0_9, %c0_10] : memref<1x128xf32, #tpu.memory_space<vmem>>, vector<1x128xf32>
    %11 = vector.broadcast %10 : vector<1x128xf32> to vector<8x128xf32>
    %12 = arith.addf %9, %11 : vector<8x128xf32>
    %cst_11 = arith.constant 0.000000e+00 : f32
    %13 = vector.broadcast %cst_11 : f32 to vector<8x128xf32>
    %14 = arith.maximumf %12, %13 : vector<8x128xf32>
    %c0_12 = arith.constant 0 : index
    %c0_13 = arith.constant 0 : index
    %15 = vector.load %arg6[%c0_12, %c0_13] : memref<128x128xf32, #tpu.memory_space<vmem>>, vector<128x128xf32>
    %cst_14 = arith.constant dense<0.000000e+00> : vector<8x128xf32>
    %16 = tpu.matmul %14, %15, %cst_14 {dimension_numbers = #tpu.dot_dimension_numbers<[1], [0], [0], [1], [0, 0, 1, 1], [], []>} : vector<8x128xf32>, vector<128x128xf32>, vector<8x128xf32> -> vector<8x128xf32>
    %c0_15 = arith.constant 0 : index
    %c0_16 = arith.constant 0 : index
    %17 = vector.load %arg7[%c0_15, %c0_16] : memref<1x128xf32, #tpu.memory_space<vmem>>, vector<1x128xf32>
    %18 = vector.broadcast %17 : vector<1x128xf32> to vector<8x128xf32>
    %19 = arith.addf %16, %18 : vector<8x128xf32>
    %cst_17 = arith.constant 0.000000e+00 : f32
    %20 = vector.broadcast %cst_17 : f32 to vector<8x128xf32>
    %21 = arith.maximumf %19, %20 : vector<8x128xf32>
    %c0_18 = arith.constant 0 : index
    %c0_19 = arith.constant 0 : index
    %22 = vector.load %arg8[%c0_18, %c0_19] : memref<128x128xf32, #tpu.memory_space<vmem>>, vector<128x128xf32>
    %cst_20 = arith.constant dense<0.000000e+00> : vector<8x128xf32>
    %23 = tpu.matmul %21, %22, %cst_20 {dimension_numbers = #tpu.dot_dimension_numbers<[1], [0], [0], [1], [0, 0, 1, 1], [], []>} : vector<8x128xf32>, vector<128x128xf32>, vector<8x128xf32> -> vector<8x128xf32>
    %c0_21 = arith.constant 0 : index
    %c0_22 = arith.constant 0 : index
    %24 = vector.load %arg9[%c0_21, %c0_22] : memref<1x128xf32, #tpu.memory_space<vmem>>, vector<1x128xf32>
    %25 = vector.broadcast %24 : vector<1x128xf32> to vector<8x128xf32>
    %26 = arith.addf %23, %25 : vector<8x128xf32>
    %27 = tpu.iota {dimensions = array<i32: 1>} : vector<8x128xi32>
    %c8_i32 = arith.constant 8 : i32
    %28 = vector.broadcast %c8_i32 : i32 to vector<8x128xi32>
    %29 = arith.cmpi slt, %27, %28 : vector<8x128xi32>
    %cst_23 = arith.constant 0.000000e+00 : f32
    %30 = vector.broadcast %cst_23 : f32 to vector<8x128xf32>
    %31 = arith.select %29, %26, %30 : vector<8x128xi1>, vector<8x128xf32>
    %cst_24 = arith.constant dense<0.000000e+00> : vector<8xf32>
    %32 = vector.multi_reduction <add>, %31, %cst_24 [1] : vector<8x128xf32> to vector<8xf32>
    %33 = vector.shape_cast %32 : vector<8xf32> to vector<8x1xf32>
    %cst_25 = arith.constant 1.250000e-01 : f32
    %34 = vector.broadcast %cst_25 : f32 to vector<8x1xf32>
    %35 = arith.mulf %33, %34 : vector<8x1xf32>
    %36 = vector.extract_strided_slice %26 {offsets = [0, 8], sizes = [8, 1], strides = [1, 1]} : vector<8x128xf32> to vector<8x1xf32>
    %37 = vector.extract_strided_slice %31 {offsets = [0, 0], sizes = [8, 8], strides = [1, 1]} : vector<8x128xf32> to vector<8x8xf32>
    %38 = arith.subf %36, %35 : vector<8x1xf32>
    %39 = vector.broadcast %38 : vector<8x1xf32> to vector<8x8xf32>
    %40 = arith.addf %37, %39 : vector<8x8xf32>
    %c0_26 = arith.constant 0 : index
    %c0_27 = arith.constant 0 : index
    %41 = vector.load %arg10[%c0_26, %c0_27] : memref<8x8xf32, #tpu.memory_space<vmem>>, vector<8x8xf32>
    tpu.vector_store %arg10[%c0_26, %c0_27], %40 {strides = array<i32>} : memref<8x8xf32, #tpu.memory_space<vmem>>, vector<8x8xf32>,
    return
  }
  func.func @transform_0(%arg0: i32) -> (i32, i32) {
    %c0_i32 = arith.constant 0 : i32
    %c0_i32_0 = arith.constant 0 : i32
    return %arg0, %c0_i32 : i32, i32
  }
  func.func @transform_1(%arg0: i32) -> (i32, i32) {
    %c0_i32 = arith.constant 0 : i32
    %c0_i32_0 = arith.constant 0 : i32
    %c0_i32_1 = arith.constant 0 : i32
    return %c0_i32, %c0_i32_0 : i32, i32
  }
  func.func @transform_2(%arg0: i32) -> (i32, i32) {
    %c0_i32 = arith.constant 0 : i32
    %c0_i32_0 = arith.constant 0 : i32
    %c0_i32_1 = arith.constant 0 : i32
    return %c0_i32, %c0_i32_0 : i32, i32
  }
  func.func @transform_3(%arg0: i32) -> (i32, i32) {
    %c0_i32 = arith.constant 0 : i32
    %c0_i32_0 = arith.constant 0 : i32
    %c0_i32_1 = arith.constant 0 : i32
    return %c0_i32, %c0_i32_0 : i32, i32
  }
  func.func @transform_4(%arg0: i32) -> (i32, i32) {
    %c0_i32 = arith.constant 0 : i32
    %c0_i32_0 = arith.constant 0 : i32
    %c0_i32_1 = arith.constant 0 : i32
    return %c0_i32, %c0_i32_0 : i32, i32
  }
  func.func @transform_5(%arg0: i32) -> (i32, i32) {
    %c0_i32 = arith.constant 0 : i32
    %c0_i32_0 = arith.constant 0 : i32
    %c0_i32_1 = arith.constant 0 : i32
    return %c0_i32, %c0_i32_0 : i32, i32
  }
  func.func @transform_6(%arg0: i32) -> (i32, i32) {
    %c0_i32 = arith.constant 0 : i32
    %c0_i32_0 = arith.constant 0 : i32
    %c0_i32_1 = arith.constant 0 : i32
    return %c0_i32, %c0_i32_0 : i32, i32
  }
  func.func @transform_7(%arg0: i32) -> (i32, i32) {
    %c0_i32 = arith.constant 0 : i32
    %c0_i32_0 = arith.constant 0 : i32
    %c0_i32_1 = arith.constant 0 : i32
    return %c0_i32, %c0_i32_0 : i32, i32
  }
  func.func @transform_8(%arg0: i32) -> (i32, i32) {
    %c0_i32 = arith.constant 0 : i32
    %c0_i32_0 = arith.constant 0 : i32
    %c0_i32_1 = arith.constant 0 : i32
    return %c0_i32, %c0_i32_0 : i32, i32
  }
  func.func @transform_9(%arg0: i32) -> (i32, i32) {
    %c0_i32 = arith.constant 0 : i32
    %c0_i32_0 = arith.constant 0 : i32
    return %arg0, %c0_i32 : i32, i32
  }
}

</mosaic_0001>

<llo_original>
// kernel: tpu_custom_call.1
$region0: #{tpu_custom_call.1}
  #allocation0 [shape = 'u32[]', space=smem, size = 0x4, offset = 0x4, fixed_abs, tag = 'smem constant byte address 0x4 - core index']
  #allocation1 [shape = 'u32[72,128]{1,0:T(1,128)}', space=vmem, size = 0x9000, scoped, tag = 'internal scratch']
  %s0 = inlined_call_operand.hbm [shape: f32[2,64], index: 0, kind: input, shape index: {}]
  %s1 = inlined_call_operand.hbm [shape: f32[64,128], index: 1, kind: input, shape index: {}]
  %s2 = inlined_call_operand.vmem [shape: f32[1,128], index: 2, kind: input, shape index: {}]
  %s3 = inlined_call_operand.hbm [shape: f32[128,128], index: 3, kind: input, shape index: {}]
  %s4 = inlined_call_operand.vmem [shape: f32[1,128], index: 4, kind: input, shape index: {}]
  %s5 = inlined_call_operand.hbm [shape: f32[128,128], index: 5, kind: input, shape index: {}]
  %s6 = inlined_call_operand.vmem [shape: f32[1,128], index: 6, kind: input, shape index: {}]
  %s7 = inlined_call_operand.hbm [shape: f32[128,128], index: 7, kind: input, shape index: {}]
  %s8 = inlined_call_operand.vmem [shape: f32[1,128], index: 8, kind: input, shape index: {}]
  %s9 = inlined_call_operand.hbm [shape: f32[2,8], index: 9, kind: output, shape index: {}]
  %s10 = sld [smem:[#allocation0]]
  $region66: #{tpu_custom_call.1} parent=0
    _
  %s12 = ssub.s32 1, %s10
  %s13 = scalar_select 0, %s12, %s10
  $region1: #{tpu_custom_call.1} parent=0
    #allocation2 [shape = 'u8[4096]{0}', space=vmem, size = 0x1000, scoped, tag = 'input window, operand 0, single buffered']
    #allocation3 [shape = 's32[1]{0}', space=sflag, size = 0x4, scoped, tag = 'scoped memory for tpu_custom_call.1']
    #allocation4 [shape = 's32[1]{0}', space=sflag, size = 0x4, scoped, tag = 'scoped memory for tpu_custom_call.1']
    #allocation5 [shape = 'u8[32768]{0}', space=vmem, size = 0x8000, scoped, tag = 'input window, operand 1, single buffered']
    #allocation6 [shape = 's32[1]{0}', space=sflag, size = 0x4, scoped, tag = 'scoped memory for tpu_custom_call.1']
    #allocation7 [shape = 'u8[65536]{0}', space=vmem, size = 0x10000, scoped, tag = 'input window, operand 3, single buffered']
    #allocation8 [shape = 'u8[65536]{0}', space=vmem, size = 0x10000, scoped, tag = 'input window, operand 5, single buffered']
    #allocation9 [shape = 's32[1]{0}', space=sflag, size = 0x4, scoped, tag = 'scoped memory for tpu_custom_call.1']
    #allocation10 [shape = 'u8[65536]{0}', space=vmem, size = 0x10000, scoped, tag = 'input window, operand 7, single buffered']
    #allocation11 [shape = 'u8[4096]{0}', space=vmem, size = 0x1000, scoped, tag = 'output window, operand 0, single buffered']
    %14 = vsyncpa [#allocation3], 0
    %15 = vsyncpa [#allocation6], 0
    %16 = vsyncpa [#allocation9], 0
    %17 = vsyncpa [#allocation4], 0
    // Predicated region
    $region2: #{tpu_custom_call.1} parent=1 // pred_check
      _
    $region3: #{tpu_custom_call.1} parent=1 // pred_check_branch
      %19 = sbr.rel (0) target = $region5
    $region4: #{tpu_custom_call.1} parent=1 // pred_region
      %21 = vsyncadd [#allocation3], 96
      %s22 = sshll.u32 %s0, 4
      %s23 = int_to_ptr.hbm [resolvable:$true] %s22
      %s24 = sshll.u32 [#allocation2], 4
      %s25 = int_to_ptr.vmem [resolvable:$true] %s24
      %30 = dma.hbm_to_vmem [thread:$0]  %s23, 32, %s25, [#allocation3], 32, 32, 2
    $region5: #{tpu_custom_call.1} parent=1 // pred_fallthru
      _
    // Predicated region
    $region6: #{tpu_custom_call.1} parent=1 // pred_check
      _
    $region7: #{tpu_custom_call.1} parent=1 // pred_check_branch
      %32 = sbr.rel (0) target = $region9
    $region8: #{tpu_custom_call.1} parent=1 // pred_region
      %34 = vsyncadd [#allocation6], 0
      %s35 = sshll.u32 %s1, 4
      %s36 = int_to_ptr.hbm [resolvable:$true] %s35
      %s37 = sshll.u32 [#allocation5], 4
      %s38 = int_to_ptr.vmem [resolvable:$true] %s37
      %43 = dma.hbm_to_vmem [thread:$0]  %s36, 1024, %s38, [#allocation6], 128, 128, 8
    $region9: #{tpu_custom_call.1} parent=1 // pred_fallthru
      _
    // Predicated region
    $region10: #{tpu_custom_call.1} parent=1 // pred_check
      _
    $region11: #{tpu_custom_call.1} parent=1 // pred_check_branch
      %45 = sbr.rel (0) target = $region13
    $region12: #{tpu_custom_call.1} parent=1 // pred_region
      _
    $region13: #{tpu_custom_call.1} parent=1 // pred_fallthru
      _
    // Predicated region
    $region14: #{tpu_custom_call.1} parent=1 // pred_check
      _
    $region15: #{tpu_custom_call.1} parent=1 // pred_check_branch
      %47 = sbr.rel (0) target = $region17
    $region16: #{tpu_custom_call.1} parent=1 // pred_region
      %49 = vsyncadd [#allocation6], 0
      %s50 = sshll.u32 %s3, 4
      %s51 = int_to_ptr.hbm [resolvable:$true] %s50
      %s52 = sshll.u32 [#allocation7], 4
      %s53 = int_to_ptr.vmem [resolvable:$true] %s52
      %58 = dma.hbm_to_vmem [thread:$0]  %s51, 2048, %s53, [#allocation6], 128, 128, 8
    $region17: #{tpu_custom_call.1} parent=1 // pred_fallthru
      _
    // Predicated region
    $region18: #{tpu_custom_call.1} parent=1 // pred_check
      _
    $region19: #{tpu_custom_call.1} parent=1 // pred_check_branch
      %60 = sbr.rel (0) target = $region21
    $region20: #{tpu_custom_call.1} parent=1 // pred_region
      _
    $region21: #{tpu_custom_call.1} parent=1 // pred_fallthru
      _
    // Predicated region
    $region22: #{tpu_custom_call.1} parent=1 // pred_check
      _
    $region23: #{tpu_custom_call.1} parent=1 // pred_check_branch
      %62 = sbr.rel (0) target = $region25
    $region24: #{tpu_custom_call.1} parent=1 // pred_region
      %64 = vsyncadd [#allocation9], 0
      %s65 = sshll.u32 %s5, 4
      %s66 = int_to_ptr.hbm [resolvable:$true] %s65
      %s67 = sshll.u32 [#allocation8], 4
      %s68 = int_to_ptr.vmem [resolvable:$true] %s67
      %73 = dma.hbm_to_vmem [thread:$0]  %s66, 2048, %s68, [#allocation9], 128, 128, 8
    $region25: #{tpu_custom_call.1} parent=1 // pred_fallthru
      _
    // Predicated region
    $region26: #{tpu_custom_call.1} parent=1 // pred_check
      _
    $region27: #{tpu_custom_call.1} parent=1 // pred_check_branch
      %75 = sbr.rel (0) target = $region29
    $region28: #{tpu_custom_call.1} parent=1 // pred_region
      _
    $region29: #{tpu_custom_call.1} parent=1 // pred_fallthru
      _
    // Predicated region
    $region30: #{tpu_custom_call.1} parent=1 // pred_check
      _
    $region31: #{tpu_custom_call.1} parent=1 // pred_check_branch
      %77 = sbr.rel (0) target = $region33
    $region32: #{tpu_custom_call.1} parent=1 // pred_region
      %79 = vsyncadd [#allocation9], 0
      %s80 = sshll.u32 %s7, 4
      %s81 = int_to_ptr.hbm [resolvable:$true] %s80
      %s82 = sshll.u32 [#allocation10], 4
      %s83 = int_to_ptr.vmem [resolvable:$true] %s82
      %88 = dma.hbm_to_vmem [thread:$0]  %s81, 2048, %s83, [#allocation9], 128, 128, 8
    $region33: #{tpu_custom_call.1} parent=1 // pred_fallthru
      _
    // Predicated region
    $region34: #{tpu_custom_call.1} parent=1 // pred_check
      _
    $region35: #{tpu_custom_call.1} parent=1 // pred_check_branch
      %90 = sbr.rel (0) target = $region37
    $region36: #{tpu_custom_call.1} parent=1 // pred_region
      _
    $region37: #{tpu_custom_call.1} parent=1 // pred_fallthru
      _
    // Predicated region
    $region38: #{tpu_custom_call.1} parent=1 // pred_check
      _
    $region39: #{tpu_custom_call.1} parent=1 // pred_check_branch
      %92 = sbr.rel (0) target = $region41
    $region40: #{tpu_custom_call.1} parent=1 // pred_region
      %94 = dma.done [#allocation3], 128
    $region41: #{tpu_custom_call.1} parent=1 // pred_fallthru
      _
    // Predicated region
    $region42: #{tpu_custom_call.1} parent=1 // pred_check
      _
    $region43: #{tpu_custom_call.1} parent=1 // pred_check_branch
      %96 = sbr.rel (0) target = $region45
    $region44: #{tpu_custom_call.1} parent=1 // pred_region
      %98 = dma.done [#allocation6], 1024
    $region45: #{tpu_custom_call.1} parent=1 // pred_fallthru
      _
    // Predicated region
    $region46: #{tpu_custom_call.1} parent=1 // pred_check
      _
    $region47: #{tpu_custom_call.1} parent=1 // pred_check_branch
      %100 = sbr.rel (0) target = $region49
    $region48: #{tpu_custom_call.1} parent=1 // pred_region
      %102 = dma.done [#allocation6], 2048
    $region49: #{tpu_custom_call.1} parent=1 // pred_fallthru
      _
    // Predicated region
    $region50: #{tpu_custom_call.1} parent=1 // pred_check
      _
    $region51: #{tpu_custom_call.1} parent=1 // pred_check_branch
      %104 = sbr.rel (0) target = $region53
    $region52: #{tpu_custom_call.1} parent=1 // pred_region
      %106 = dma.done [#allocation9], 2048
    $region53: #{tpu_custom_call.1} parent=1 // pred_fallthru
      _
    // Predicated region
    $region54: #{tpu_custom_call.1} parent=1 // pred_check
      _
    $region55: #{tpu_custom_call.1} parent=1 // pred_check_branch
      %108 = sbr.rel (0) target = $region57
    $region56: #{tpu_custom_call.1} parent=1 // pred_region
      %110 = dma.done [#allocation9], 2048
    $region57: #{tpu_custom_call.1} parent=1 // pred_fallthru
      _
    %v111 = vld [vmem:[#allocation2] sm:$0xff]
    %v112 = vld [vmem:[#allocation5] sm:$0xff]
    %v113 = vld [vmem:[#allocation5 + $0x8] sm:$0xff]
    %v114 = vld [vmem:[#allocation5 + $0x10] sm:$0xff]
    %v115 = vld [vmem:[#allocation5 + $0x18] sm:$0xff]
    %v116 = vld [vmem:[#allocation5 + $0x20] sm:$0xff]
    %v117 = vld [vmem:[#allocation5 + $0x28] sm:$0xff]
    %v118 = vld [vmem:[#allocation5 + $0x30] sm:$0xff]
    %v119 = vld [vmem:[#allocation5 + $0x38] sm:$0xff]
    %v120 = vld [vmem:[%s2] sm:$0x1]
    %v122 = vperm.slane %v120, 0
    %vm124 = vcmask 523264
    %v126 = vsel %vm124, %v111, 0
    %128 = vmatpush.msra.mxu0 0.0
    %129 = vmatpush.msra.mxu0 0.0
    %130 = vmatpush.msra.mxu0 0.0
    %131 = vmatpush.msra.mxu0 0.0
    %132 = vmatpush.msra.mxu0 0.0
    %133 = vmatpush.msra.mxu0 0.0
    %134 = vmatpush.msra.mxu0 0.0
    %135 = vmatpush.msra.mxu0 0.0
    %136 = vmatpush.msra.mxu0 %v119
    %137 = vmatpush.msra.mxu0 %v118
    %138 = vmatpush.msra.mxu0 %v117
    %139 = vmatpush.msra.mxu0 %v116
    %140 = vmatpush.msra.mxu0 %v115
    %141 = vmatpush.msra.mxu0 %v114
    %142 = vmatpush.msra.mxu0 %v113
    %143 = vmatpush.msra.mxu0 %v112
    %144 = vmatmul.f32.gmra.mxu0 %v126
    %v145 = vpop.f32.mrf.mxu0
    %v146 = vadd.f32 %v122, %v145
    %147 = vdwg.mxu0
    %v148 = vmax.f32 %v146, 0.0
    %v149 = vld [vmem:[#allocation7] sm:$0xff]
    %v150 = vld [vmem:[#allocation7 + $0x8] sm:$0xff]
    %v151 = vld [vmem:[#allocation7 + $0x10] sm:$0xff]
    %v152 = vld [vmem:[#allocation7 + $0x18] sm:$0xff]
    %v153 = vld [vmem:[#allocation7 + $0x20] sm:$0xff]
    %v154 = vld [vmem:[#allocation7 + $0x28] sm:$0xff]
    %v155 = vld [vmem:[#allocation7 + $0x30] sm:$0xff]
    %v156 = vld [vmem:[#allocation7 + $0x38] sm:$0xff]
    %v157 = vld [vmem:[#allocation7 + $0x40] sm:$0xff]
    %v158 = vld [vmem:[#allocation7 + $0x48] sm:$0xff]
    %v159 = vld [vmem:[#allocation7 + $0x50] sm:$0xff]
    %v160 = vld [vmem:[#allocation7 + $0x58] sm:$0xff]
    %v161 = vld [vmem:[#allocation7 + $0x60] sm:$0xff]
    %v162 = vld [vmem:[#allocation7 + $0x68] sm:$0xff]
    %v163 = vld [vmem:[#allocation7 + $0x70] sm:$0xff]
    %v164 = vld [vmem:[#allocation7 + $0x78] sm:$0xff]
    %v165 = vld [vmem:[%s4] sm:$0x1]
    %v167 = vperm.slane %v165, 0
    %169 = vmatpush.msra.mxu0 %v164
    %170 = vmatpush.msra.mxu0 %v163
    %171 = vmatpush.msra.mxu0 %v162
    %172 = vmatpush.msra.mxu0 %v161
    %173 = vmatpush.msra.mxu0 %v160
    %174 = vmatpush.msra.mxu0 %v159
    %175 = vmatpush.msra.mxu0 %v158
    %176 = vmatpush.msra.mxu0 %v157
    %177 = vmatpush.msra.mxu0 %v156
    %178 = vmatpush.msra.mxu0 %v155
    %179 = vmatpush.msra.mxu0 %v154
    %180 = vmatpush.msra.mxu0 %v153
    %181 = vmatpush.msra.mxu0 %v152
    %182 = vmatpush.msra.mxu0 %v151
    %183 = vmatpush.msra.mxu0 %v150
    %184 = vmatpush.msra.mxu0 %v149
    %185 = vmatmul.f32.gmra.mxu0 %v148
    %v186 = vpop.f32.mrf.mxu0
    %v187 = vadd.f32 %v167, %v186
    %188 = vdwg.mxu0
    %v189 = vmax.f32 %v187, 0.0
    %v190 = vld [vmem:[#allocation8] sm:$0xff]
    %v191 = vld [vmem:[#allocation8 + $0x8] sm:$0xff]
    %v192 = vld [vmem:[#allocation8 + $0x10] sm:$0xff]
    %v193 = vld [vmem:[#allocation8 + $0x18] sm:$0xff]
    %v194 = vld [vmem:[#allocation8 + $0x20] sm:$0xff]
    %v195 = vld [vmem:[#allocation8 + $0x28] sm:$0xff]
    %v196 = vld [vmem:[#allocation8 + $0x30] sm:$0xff]
    %v197 = vld [vmem:[#allocation8 + $0x38] sm:$0xff]
    %v198 = vld [vmem:[#allocation8 + $0x40] sm:$0xff]
    %v199 = vld [vmem:[#allocation8 + $0x48] sm:$0xff]
    %v200 = vld [vmem:[#allocation8 + $0x50] sm:$0xff]
    %v201 = vld [vmem:[#allocation8 + $0x58] sm:$0xff]
    %v202 = vld [vmem:[#allocation8 + $0x60] sm:$0xff]
    %v203 = vld [vmem:[#allocation8 + $0x68] sm:$0xff]
    %v204 = vld [vmem:[#allocation8 + $0x70] sm:$0xff]
    %v205 = vld [vmem:[#allocation8 + $0x78] sm:$0xff]
    %v206 = vld [vmem:[%s6] sm:$0x1]
    %v208 = vperm.slane %v206, 0
    %210 = vmatpush.msra.mxu0 %v205
    %211 = vmatpush.msra.mxu0 %v204
    %212 = vmatpush.msra.mxu0 %v203
    %213 = vmatpush.msra.mxu0 %v202
    %214 = vmatpush.msra.mxu0 %v201
    %215 = vmatpush.msra.mxu0 %v200
    %216 = vmatpush.msra.mxu0 %v199
    %217 = vmatpush.msra.mxu0 %v198
    %218 = vmatpush.msra.mxu0 %v197
    %219 = vmatpush.msra.mxu0 %v196
    %220 = vmatpush.msra.mxu0 %v195
    %221 = vmatpush.msra.mxu0 %v194
    %222 = vmatpush.msra.mxu0 %v193
    %223 = vmatpush.msra.mxu0 %v192
    %224 = vmatpush.msra.mxu0 %v191
    %225 = vmatpush.msra.mxu0 %v190
    %226 = vmatmul.f32.gmra.mxu0 %v189
    %v227 = vpop.f32.mrf.mxu0
    %v228 = vadd.f32 %v208, %v227
    %229 = vdwg.mxu0
    %v230 = vmax.f32 %v228, 0.0
    %v231 = vld [vmem:[#allocation10] sm:$0xff]
    %v232 = vld [vmem:[#allocation10 + $0x8] sm:$0xff]
    %v233 = vld [vmem:[#allocation10 + $0x10] sm:$0xff]
    %v234 = vld [vmem:[#allocation10 + $0x18] sm:$0xff]
    %v235 = vld [vmem:[#allocation10 + $0x20] sm:$0xff]
    %v236 = vld [vmem:[#allocation10 + $0x28] sm:$0xff]
    %v237 = vld [vmem:[#allocation10 + $0x30] sm:$0xff]
    %v238 = vld [vmem:[#allocation10 + $0x38] sm:$0xff]
    %v239 = vld [vmem:[#allocation10 + $0x40] sm:$0xff]
    %v240 = vld [vmem:[#allocation10 + $0x48] sm:$0xff]
    %v241 = vld [vmem:[#allocation10 + $0x50] sm:$0xff]
    %v242 = vld [vmem:[#allocation10 + $0x58] sm:$0xff]
    %v243 = vld [vmem:[#allocation10 + $0x60] sm:$0xff]
    %v244 = vld [vmem:[#allocation10 + $0x68] sm:$0xff]
    %v245 = vld [vmem:[#allocation10 + $0x70] sm:$0xff]
    %v246 = vld [vmem:[#allocation10 + $0x78] sm:$0xff]
    %v247 = vld [vmem:[%s8] sm:$0x1]
    %v249 = vperm.slane %v247, 0
    %251 = vmatpush.msra.mxu0 %v246
    %252 = vmatpush.msra.mxu0 %v245
    %253 = vmatpush.msra.mxu0 %v244
    %254 = vmatpush.msra.mxu0 %v243
    %255 = vmatpush.msra.mxu0 %v242
    %256 = vmatpush.msra.mxu0 %v241
    %257 = vmatpush.msra.mxu0 %v240
    %258 = vmatpush.msra.mxu0 %v239
    %259 = vmatpush.msra.mxu0 %v238
    %260 = vmatpush.msra.mxu0 %v237
    %261 = vmatpush.msra.mxu0 %v236
    %262 = vmatpush.msra.mxu0 %v235
    %263 = vmatpush.msra.mxu0 %v234
    %264 = vmatpush.msra.mxu0 %v233
    %265 = vmatpush.msra.mxu0 %v232
    %266 = vmatpush.msra.mxu0 %v231
    %267 = vmatmul.f32.gmra.mxu0 %v230
    %v268 = vpop.f32.mrf.mxu0
    %v269 = vadd.f32 %v249, %v268
    %270 = vdwg.mxu0
    %v271 = vlaneseq
    %v272 = vand.u32 %v271, 127
    %vm273 = vcmp.lt.s32.totalorder %v272, 8
    %v274 = vsel %vm273, %v269, 0.0
    %275 = vadd.xlane.f32.xlu0 %v274
    %v276 = vpop.xlane.xlu0 %275
    %v277 = vmul.f32 %v276, 0.125
    %v278 = vsub.f32 %v269, %v277
    %280 = vset.pattern.permute.xlu0 8
    %281 = vperm.xlu0 %280, %v278
    %v282 = vpop.permute.xlu0 %281
    %v284 = vadd.f32 %v274, %v282
    %vm285 = vcmask 64512
    %286 = vst.msk [vmem:[#allocation11] sm:$0xff] %vm285, %v284
    // Predicated region
    $region58: #{tpu_custom_call.1} parent=1 // pred_check
      _
    $region59: #{tpu_custom_call.1} parent=1 // pred_check_branch
      %288 = sbr.rel (0) target = $region61
    $region60: #{tpu_custom_call.1} parent=1 // pred_region
      %290 = vsyncadd [#allocation4], 96
      %s291 = sshll.u32 [#allocation11], 4
      %s292 = int_to_ptr.vmem [resolvable:$true] %s291
      %s293 = sshll.u32 %s9, 4
      %s294 = int_to_ptr.hbm [resolvable:$true] %s293
      %299 = dma.vmem_to_hbm [thread:$0]  %s292, 32, %s294, [#allocation4], 32, 32, 2
    $region61: #{tpu_custom_call.1} parent=1 // pred_fallthru
      _
    // Predicated region
    $region62: #{tpu_custom_call.1} parent=1 // pred_check
      _
    $region63: #{tpu_custom_call.1} parent=1 // pred_check_branch
      %301 = sbr.rel (0) target = $region65
    $region64: #{tpu_custom_call.1} parent=1 // pred_region
      %303 = dma.done [#allocation4], 128
    $region65: #{tpu_custom_call.1} parent=1 // pred_fallthru
      _
    %304 = vsyncpa [#allocation3], 1
    %305 = vsyncpa [#allocation6], 1
    %306 = vsyncpa [#allocation9], 1
    %307 = vsyncpa [#allocation4], 1

</llo_original>
